<compile_context>
chip_gen: v6e
topology: v6e:2x2x1
jax: 0.10.0
libtpu: 0.0.40
codegen_flags: <defaults>
</compile_context>

<pallas_src>
import jax
import jax.numpy as jnp
from jax import lax
from jax.experimental import pallas as pl
from jax.experimental.pallas import tpu as pltpu


def _round_up(x, m):
    return (x + m - 1) // m * m


def _l2_normalize_kernel(z_ref, o_ref):
    # Row-wise L2 normalize, matching F.normalize(p=2, dim=1, eps=1e-12):
    # x * rsqrt(max(sum(x^2), eps^2)).  Zero (padded) rows stay exactly zero.
    z = z_ref[...]
    ssq = jnp.sum(z * z, axis=1, keepdims=True)
    o_ref[...] = z * lax.rsqrt(jnp.maximum(ssq, 1e-24))


def _geometry(B, D):
    """Static tile geometry: column tile Tc, row tile Tr = m*Tc, paddings."""
    D_pad = _round_up(D, 128)                 # lane-aligned feature dim
    Tc = min(128, _round_up(B, 8))            # column tile (sublane-aligned)
    B_pad = _round_up(B, Tc)
    n_pad = 2 * B_pad
    num_col_tiles = n_pad // Tc
    # Row tile as large as possible: column tiles are streamed from HBM once
    # per row-tile sweep, so flops/byte on that stream is Tr/2.
    budget = 24 * 1024 * 1024                 # pipeline double-buffer budget
    best_m = 1
    for m in range(num_col_tiles, 0, -1):
        if num_col_tiles % m:
            continue
        Tr = m * Tc
        if Tr > 512:
            continue
        pipe_bytes = (2 * Tr * D_pad + 2 * Tc * D_pad + 2 * Tr) * 4
        if pipe_bytes > budget:
            continue
        best_m = m
        break
    Tr = best_m * Tc
    return D_pad, Tc, Tr, B_pad, n_pad, num_col_tiles


def _make_ntxent_kernel(Tr, Tc, B, B_pad, num_col_tiles):
    """Tiled NT-Xent kernel for static tile/batch geometry."""
    m = Tr // Tc                 # column chunks per row tile (static)
    half_c = B_pad // Tc         # partner offset in column tiles (static)
    padded = (B != B_pad)        # whether batch rows were padded (static)

    def kernel(inv_t_ref, zrow_ref, zcol_ref, out_ref,
               denom_acc, diag_acc, pos_acc):
        i = pl.program_id(0)     # row tile ("parallel")
        k = pl.program_id(1)     # col tile (reduction axis, "arbitrary")

        @pl.when(k == 0)
        def _init():
            denom_acc[...] = jnp.zeros_like(denom_acc)
            diag_acc[...] = jnp.zeros_like(diag_acc)
            pos_acc[...] = jnp.zeros_like(pos_acc)

        inv_t = inv_t_ref[0]

        # (Tr, Dp) x (Tc, Dp) contracting the feature dim -> (Tr, Tc) on MXU.
        s = lax.dot_general(
            zrow_ref[...], zcol_ref[...],
            dimension_numbers=(((1,), (1,)), ((), ())),
            preferred_element_type=jnp.float32,
        ) * inv_t

        # cosine <= 1  =>  s <= inv_t, so exp(s - inv_t) never overflows.
        e = jnp.exp(s - inv_t)

        if padded:
            # Mask padded (zero) columns out of the denominator.
            cols = k * Tc + lax.broadcasted_iota(jnp.int32, (1, Tc), 1)
            cvalid = ((cols % B_pad) < B).astype(jnp.float32)
            denom_acc[...] += jnp.sum(e * cvalid, axis=1, keepdims=True)
        else:
            denom_acc[...] += jnp.sum(e, axis=1, keepdims=True)

        # Self-similarity entries living in this column tile: local row chunk
        # j_self sits on the shifted diagonal  r == c + j_self*Tc.
        j_self = k - i * m
        @pl.when((j_self >= 0) & (j_self < m))
        def _self():
            r = lax.broadcasted_iota(jnp.int32, (Tr, Tc), 0)
            c = lax.broadcasted_iota(jnp.int32, (Tr, Tc), 1)
            diag_acc[...] += jnp.sum(
                jnp.where(r == c + j_self * Tc, e, 0.0), axis=1, keepdims=True)

        # Positive-pair entries (partner(r) = (r +/- B_pad) mod n_pad): local
        # row chunk j_pos on the shifted diagonal.  Offset keeps dividend >= 0.
        j_pos = (k - half_c - i * m + 2 * num_col_tiles) % num_col_tiles
        @pl.when(j_pos < m)
        def _pos():
            r = lax.broadcasted_iota(jnp.int32, (Tr, Tc), 0)
            c = lax.broadcasted_iota(jnp.int32, (Tr, Tc), 1)
            pos_acc[...] += jnp.sum(
                jnp.where(r == c + j_pos * Tc, s, 0.0), axis=1, keepdims=True)

        @pl.when(k == num_col_tiles - 1)
        def _finalize():
            # denom_acc is exp(-inv_t)-scaled; undo the shift inside the log.
            denom_shifted = denom_acc[...] - diag_acc[...]
            per_row = jnp.log(denom_shifted) + inv_t - pos_acc[...]
            if padded:
                rows = i * Tr + lax.broadcasted_iota(jnp.int32, (Tr, 1), 0)
                rvalid = ((rows % B_pad) < B).astype(jnp.float32)
                per_row = per_row * rvalid
            out_ref[...] = per_row

    return kernel


def ntxent_loss(z1, z2, t):
    z1 = jnp.asarray(z1, jnp.float32)
    z2 = jnp.asarray(z2, jnp.float32)
    B, D = z1.shape
    D_pad, Tc, Tr, B_pad, n_pad, num_col_tiles = _geometry(B, D)

    pad_r, pad_c = B_pad - B, D_pad - D
    # Concatenate (not interleave) the two views: partner(r) = (r + B_pad) % n_pad.
    z = jnp.concatenate(
        [jnp.pad(z1, ((0, pad_r), (0, pad_c))),
         jnp.pad(z2, ((0, pad_r), (0, pad_c)))], axis=0)   # (n_pad, D_pad)

    # Pass 1: L2-normalize rows once.
    zn = pl.pallas_call(
        _l2_normalize_kernel,
        out_shape=jax.ShapeDtypeStruct((n_pad, D_pad), jnp.float32),
        grid=(num_col_tiles,),
        in_specs=[pl.BlockSpec((Tc, D_pad), lambda i: (i, 0))],
        out_specs=pl.BlockSpec((Tc, D_pad), lambda i: (i, 0)),
        compiler_params=pltpu.CompilerParams(
            dimension_semantics=("parallel",),
            vmem_limit_bytes=48 * 1024 * 1024),
    )(z)

    inv_t = (1.0 / jnp.asarray(t, jnp.float32)).reshape((1,))

    # Pass 2: tiled similarity + online denominator + positive extraction.
    kernel = _make_ntxent_kernel(Tr, Tc, B, B_pad, num_col_tiles)
    per_row = pl.pallas_call(
        kernel,
        out_shape=jax.ShapeDtypeStruct((n_pad, 1), jnp.float32),
        grid_spec=pltpu.PrefetchScalarGridSpec(
            num_scalar_prefetch=1,                      # inv_t -> SMEM
            grid=(n_pad // Tr, num_col_tiles),
            in_specs=[
                pl.BlockSpec((Tr, D_pad), lambda i, k, s: (i, 0)),   # row tile
                pl.BlockSpec((Tc, D_pad), lambda i, k, s: (k, 0)),   # col tile
            ],
            out_specs=pl.BlockSpec((Tr, 1), lambda i, k, s: (i, 0)),
            scratch_shapes=[
                pltpu.VMEM((Tr, 1), jnp.float32),   # denom accumulator
                pltpu.VMEM((Tr, 1), jnp.float32),   # self (diag) exp term
                pltpu.VMEM((Tr, 1), jnp.float32),   # positive similarity
            ],
        ),
        compiler_params=pltpu.CompilerParams(
            dimension_semantics=("parallel", "arbitrary"),
            vmem_limit_bytes=48 * 1024 * 1024),
    )(inv_t, zn, zn)

    return jnp.sum(per_row) / (2.0 * B)


def ntxent_loss_ref(z1, z2, t):
    # Pure-JAX reference mirroring the PyTorch forward exactly.
    def normalize(x):
        nrm = jnp.sqrt(jnp.sum(x * x, axis=1, keepdims=True))
        return x / jnp.maximum(nrm, 1e-12)

    z1 = normalize(z1)
    z2 = normalize(z2)
    B = z1.shape[0]
    z = jnp.stack((z1, z2), axis=1).reshape(2 * B, -1)
    sims = (z @ z.T) / t
    exp_sim = jnp.exp(sims)
    mask = 1.0 - jnp.eye(2 * B)
    denom = jnp.sum(exp_sim * mask, axis=1, keepdims=True)
    L = -jnp.log(exp_sim / denom)
    pos = jnp.kron(jnp.eye(B), 1.0 - jnp.eye(2))
    return jnp.sum(L * pos) / (2 * B)


if __name__ == "__main__":
    key = jax.random.PRNGKey(0)
    k1, k2 = jax.random.split(key)
    B, D = 4, 32
    t = 0.5  # module's __init__ temperature

    z1 = jax.random.normal(k1, (B, D), dtype=jnp.float32)
    z2 = jax.random.normal(k2, (B, D), dtype=jnp.float32)

    loss = jax.block_until_ready(jax.jit(ntxent_loss)(z1, z2, t))
    ref = jax.block_until_ready(ntxent_loss_ref(z1, z2, t))

    assert jnp.allclose(loss, ref, rtol=1e-5, atol=1e-5), (loss, ref)
    print("KERNEL_OK")
</pallas_src>

<mosaic_0001>
module attributes {stable_mosaic.version = 11 : i64} {
  func.func @_l2_normalize_kernel(%arg0: i32, %arg1: memref<8x128xf32, #tpu.memory_space<vmem>>, %arg2: memref<8x128xf32, #tpu.memory_space<vmem>>) attributes {dimension_semantics = [#tpu.dimension_semantics<parallel>], iteration_bounds = array<i64: 2>, scalar_prefetch = 0 : i64, scratch_operands = 0 : i64, tpu.core_type = #tpu.core_type<tc>, window_params = [{transform_indices = @transform_0, window_bounds = array<i64: 8, 128>}, {transform_indices = @transform_1, window_bounds = array<i64: 8, 128>}]} {
    %c0 = arith.constant 0 : index
    %c0_0 = arith.constant 0 : index
    %0 = vector.load %arg1[%c0, %c0_0] : memref<8x128xf32, #tpu.memory_space<vmem>>, vector<8x128xf32>
    %1 = arith.mulf %0, %0 : vector<8x128xf32>
    %cst = arith.constant dense<0.000000e+00> : vector<8xf32>
    %2 = vector.multi_reduction <add>, %1, %cst [1] : vector<8x128xf32> to vector<8xf32>
    %3 = vector.shape_cast %2 : vector<8xf32> to vector<8x1xf32>
    %cst_1 = arith.constant 1.000000e-24 : f32
    %4 = vector.broadcast %cst_1 : f32 to vector<8x1xf32>
    %5 = arith.maximumf %3, %4 : vector<8x1xf32>
    %6 = math.rsqrt %5 : vector<8x1xf32>
    %7 = vector.broadcast %6 : vector<8x1xf32> to vector<8x128xf32>
    %8 = arith.mulf %0, %7 : vector<8x128xf32>
    %c0_2 = arith.constant 0 : index
    %c0_3 = arith.constant 0 : index
    %9 = vector.load %arg2[%c0_2, %c0_3] : memref<8x128xf32, #tpu.memory_space<vmem>>, vector<8x128xf32>
    tpu.vector_store %arg2[%c0_2, %c0_3], %8 {strides = array<i32>} : memref<8x128xf32, #tpu.memory_space<vmem>>, vector<8x128xf32>,
    return
  }
  func.func @transform_0(%arg0: i32) -> (i32, i32) {
    %c0_i32 = arith.constant 0 : i32
    %c0_i32_0 = arith.constant 0 : i32
    return %arg0, %c0_i32 : i32, i32
  }
  func.func @transform_1(%arg0: i32) -> (i32, i32) {
    %c0_i32 = arith.constant 0 : i32
    %c0_i32_0 = arith.constant 0 : i32
    return %arg0, %c0_i32 : i32, i32
  }
}

module attributes {stable_mosaic.version = 11 : i64} {
  func.func @kernel(%arg0: i32, %arg1: i32, %arg2: memref<1xf32, #tpu.memory_space<smem>>, %arg3: memref<16x128xf32, #tpu.memory_space<vmem>>, %arg4: memref<8x128xf32, #tpu.memory_space<vmem>>, %arg5: memref<16x1xf32, #tpu.memory_space<vmem>>, %arg6: memref<16x1xf32, #tpu.memory_space<vmem>>, %arg7: memref<16x1xf32, #tpu.memory_space<vmem>>, %arg8: memref<16x1xf32, #tpu.memory_space<vmem>>) attributes {dimension_semantics = [#tpu.dimension_semantics<parallel>, #tpu.dimension_semantics<arbitrary>], iteration_bounds = array<i64: 1, 2>, scalar_prefetch = 1 : i64, scratch_operands = 3 : i64, tpu.core_type = #tpu.core_type<tc>, window_params = [{transform_indices = @transform_0, window_bounds = array<i64: 16, 128>}, {transform_indices = @transform_1, window_bounds = array<i64: 8, 128>}, {transform_indices = @transform_2, window_bounds = array<i64: 16, 1>}]} {
    %c0_i32 = arith.constant 0 : i32
    %0 = arith.cmpi eq, %arg1, %c0_i32 : i32
    %1 = arith.extui %0 : i1 to i32
    %c0_i32_0 = arith.constant 0 : i32
    %2 = arith.cmpi ne, %1, %c0_i32_0 : i32
    scf.if %2 {
      %cst_31 = arith.constant 0.000000e+00 : f32
      %70 = vector.broadcast %cst_31 : f32 to vector<16x1xf32>
      %c0_32 = arith.constant 0 : index
      %c0_33 = arith.constant 0 : index
      %71 = vector.load %arg6[%c0_32, %c0_33] : memref<16x1xf32, #tpu.memory_space<vmem>>, vector<16x1xf32>
      tpu.vector_store %arg6[%c0_32, %c0_33], %70 {strides = array<i32>} : memref<16x1xf32, #tpu.memory_space<vmem>>, vector<16x1xf32>,
      %cst_34 = arith.constant 0.000000e+00 : f32
      %72 = vector.broadcast %cst_34 : f32 to vector<16x1xf32>
      %c0_35 = arith.constant 0 : index
      %c0_36 = arith.constant 0 : index
      %73 = vector.load %arg7[%c0_35, %c0_36] : memref<16x1xf32, #tpu.memory_space<vmem>>, vector<16x1xf32>
      tpu.vector_store %arg7[%c0_35, %c0_36], %72 {strides = array<i32>} : memref<16x1xf32, #tpu.memory_space<vmem>>, vector<16x1xf32>,
      %cst_37 = arith.constant 0.000000e+00 : f32
      %74 = vector.broadcast %cst_37 : f32 to vector<16x1xf32>
      %c0_38 = arith.constant 0 : index
      %c0_39 = arith.constant 0 : index
      %75 = vector.load %arg8[%c0_38, %c0_39] : memref<16x1xf32, #tpu.memory_space<vmem>>, vector<16x1xf32>
      tpu.vector_store %arg8[%c0_38, %c0_39], %74 {strides = array<i32>} : memref<16x1xf32, #tpu.memory_space<vmem>>, vector<16x1xf32>,
    } else {
    }
    %c0 = arith.constant 0 : index
    %3 = memref.load %arg2[%c0] : memref<1xf32, #tpu.memory_space<smem>>
    %c0_1 = arith.constant 0 : index
    %c0_2 = arith.constant 0 : index
    %4 = vector.load %arg3[%c0_1, %c0_2] : memref<16x128xf32, #tpu.memory_space<vmem>>, vector<16x128xf32>
    %c0_3 = arith.constant 0 : index
    %c0_4 = arith.constant 0 : index
    %5 = vector.load %arg4[%c0_3, %c0_4] : memref<8x128xf32, #tpu.memory_space<vmem>>, vector<8x128xf32>
    %cst = arith.constant dense<0.000000e+00> : vector<16x8xf32>
    %6 = tpu.matmul %4, %5, %cst {dimension_numbers = #tpu.dot_dimension_numbers<[1], [1], [0], [0], [0, 0, 1, 0], [], []>} : vector<16x128xf32>, vector<8x128xf32>, vector<16x8xf32> -> vector<16x8xf32>
    %7 = vector.broadcast %3 : f32 to vector<16x8xf32>
    %8 = arith.mulf %6, %7 : vector<16x8xf32>
    %9 = vector.broadcast %3 : f32 to vector<16x8xf32>
    %10 = arith.subf %8, %9 : vector<16x8xf32>
    %11 = math.exp %10 : vector<16x8xf32>
    %c8_i32 = arith.constant 8 : i32
    %12 = arith.muli %arg1, %c8_i32 : i32
    %13 = tpu.iota {dimensions = array<i32: 1>} : vector<1x8xi32>
    %14 = vector.broadcast %12 : i32 to vector<1x8xi32>
    %15 = arith.addi %14, %13 : vector<1x8xi32>
    %c8_i32_5 = arith.constant 8 : i32
    %c0_i32_6 = arith.constant 0 : i32
    %16 = arith.cmpi eq, %c8_i32_5, %c0_i32_6 : i32
    %c1_i32 = arith.constant 1 : i32
    %17 = arith.select %16, %c1_i32, %c8_i32_5 : i32
    %18 = vector.broadcast %17 : i32 to vector<1x8xi32>
    %19 = arith.remsi %15, %18 : vector<1x8xi32>
    %c0_i32_7 = arith.constant 0 : i32
    %20 = vector.broadcast %c0_i32_7 : i32 to vector<1x8xi32>
    %21 = arith.cmpi ne, %19, %20 : vector<1x8xi32>
    %c0_i32_8 = arith.constant 0 : i32
    %22 = vector.broadcast %c0_i32_8 : i32 to vector<1x8xi32>
    %23 = arith.cmpi slt, %19, %22 : vector<1x8xi32>
    %c0_i32_9 = arith.constant 0 : i32
    %24 = arith.cmpi slt, %17, %c0_i32_9 : i32
    %25 = vector.broadcast %24 : i1 to vector<1x8xi1>
    %26 = vector.broadcast %25 : vector<1x8xi1> to vector<1x8xi1>
    %27 = arith.xori %23, %26 : vector<1x8xi1>
    %28 = arith.andi %27, %21 : vector<1x8xi1>
    %29 = vector.broadcast %17 : i32 to vector<1x8xi32>
    %30 = arith.addi %19, %29 : vector<1x8xi32>
    %31 = arith.select %28, %30, %19 : vector<1x8xi1>, vector<1x8xi32>
    %c4_i32 = arith.constant 4 : i32
    %32 = vector.broadcast %c4_i32 : i32 to vector<1x8xi32>
    %33 = arith.cmpi slt, %31, %32 : vector<1x8xi32>
    %34 = arith.extui %33 : vector<1x8xi1> to vector<1x8xi32>
    %35 = arith.sitofp %34 : vector<1x8xi32> to vector<1x8xf32>
    %c0_10 = arith.constant 0 : index
    %c0_11 = arith.constant 0 : index
    %36 = vector.load %arg6[%c0_10, %c0_11] : memref<16x1xf32, #tpu.memory_space<vmem>>, vector<16x1xf32>
    %37 = vector.broadcast %35 : vector<1x8xf32> to vector<16x8xf32>
    %38 = arith.mulf %11, %37 : vector<16x8xf32>
    %cst_12 = arith.constant dense<0.000000e+00> : vector<16xf32>
    %39 = vector.multi_reduction <add>, %38, %cst_12 [1] : vector<16x8xf32> to vector<16xf32>
    %40 = vector.shape_cast %39 : vector<16xf32> to vector<16x1xf32>
    %41 = arith.addf %36, %40 : vector<16x1xf32>
    %c0_13 = arith.constant 0 : index
    %c0_14 = arith.constant 0 : index
    %42 = vector.load %arg6[%c0_13, %c0_14] : memref<16x1xf32, #tpu.memory_space<vmem>>, vector<16x1xf32>
    tpu.vector_store %arg6[%c0_13, %c0_14], %41 {strides = array<i32>} : memref<16x1xf32, #tpu.memory_space<vmem>>, vector<16x1xf32>,
    %c2_i32 = arith.constant 2 : i32
    %43 = arith.muli %arg0, %c2_i32 : i32
    %44 = arith.subi %arg1, %43 : i32
    %c0_i32_15 = arith.constant 0 : i32
    %45 = arith.cmpi sge, %44, %c0_i32_15 : i32
    %c2_i32_16 = arith.constant 2 : i32
    %46 = arith.cmpi slt, %44, %c2_i32_16 : i32
    %47 = arith.andi %45, %46 : i1
    %48 = arith.extui %47 : i1 to i32
    %c0_i32_17 = arith.constant 0 : i32
    %49 = arith.cmpi ne, %48, %c0_i32_17 : i32
    scf.if %49 {
      %70 = tpu.iota {dimensions = array<i32: 0>} : vector<16x8xi32>
      %71 = tpu.iota {dimensions = array<i32: 1>} : vector<16x8xi32>
      %c0_31 = arith.constant 0 : index
      %c0_32 = arith.constant 0 : index
      %72 = vector.load %arg7[%c0_31, %c0_32] : memref<16x1xf32, #tpu.memory_space<vmem>>, vector<16x1xf32>
      %c8_i32_33 = arith.constant 8 : i32
      %73 = arith.muli %44, %c8_i32_33 : i32
      %74 = vector.broadcast %73 : i32 to vector<16x8xi32>
      %75 = arith.addi %71, %74 : vector<16x8xi32>
      %76 = arith.cmpi eq, %70, %75 : vector<16x8xi32>
      %cst_34 = arith.constant 0.000000e+00 : f32
      %77 = vector.broadcast %cst_34 : f32 to vector<16x8xf32>
      %78 = arith.select %76, %11, %77 : vector<16x8xi1>, vector<16x8xf32>
      %cst_35 = arith.constant dense<0.000000e+00> : vector<16xf32>
      %79 = vector.multi_reduction <add>, %78, %cst_35 [1] : vector<16x8xf32> to vector<16xf32>
      %80 = vector.shape_cast %79 : vector<16xf32> to vector<16x1xf32>
      %81 = arith.addf %72, %80 : vector<16x1xf32>
      %c0_36 = arith.constant 0 : index
      %c0_37 = arith.constant 0 : index
      %82 = vector.load %arg7[%c0_36, %c0_37] : memref<16x1xf32, #tpu.memory_space<vmem>>, vector<16x1xf32>
      tpu.vector_store %arg7[%c0_36, %c0_37], %81 {strides = array<i32>} : memref<16x1xf32, #tpu.memory_space<vmem>>, vector<16x1xf32>,
    } else {
    }
    %c1_i32_18 = arith.constant 1 : i32
    %50 = arith.subi %arg1, %c1_i32_18 : i32
    %c2_i32_19 = arith.constant 2 : i32
    %51 = arith.muli %arg0, %c2_i32_19 : i32
    %52 = arith.subi %50, %51 : i32
    %c4_i32_20 = arith.constant 4 : i32
    %53 = arith.addi %52, %c4_i32_20 : i32
    %c2_i32_21 = arith.constant 2 : i32
    %c0_i32_22 = arith.constant 0 : i32
    %54 = arith.cmpi eq, %c2_i32_21, %c0_i32_22 : i32
    %c1_i32_23 = arith.constant 1 : i32
    %55 = arith.select %54, %c1_i32_23, %c2_i32_21 : i32
    %56 = arith.remsi %53, %55 : i32
    %c0_i32_24 = arith.constant 0 : i32
    %57 = arith.cmpi ne, %56, %c0_i32_24 : i32
    %c0_i32_25 = arith.constant 0 : i32
    %58 = arith.cmpi slt, %56, %c0_i32_25 : i32
    %c0_i32_26 = arith.constant 0 : i32
    %59 = arith.cmpi slt, %55, %c0_i32_26 : i32
    %60 = arith.xori %58, %59 : i1
    %61 = arith.andi %60, %57 : i1
    %62 = arith.addi %56, %55 : i32
    %63 = arith.select %61, %62, %56 : i32
    %c2_i32_27 = arith.constant 2 : i32
    %64 = arith.cmpi slt, %63, %c2_i32_27 : i32
    %65 = arith.extui %64 : i1 to i32
    %c0_i32_28 = arith.constant 0 : i32
    %66 = arith.cmpi ne, %65, %c0_i32_28 : i32
    scf.if %66 {
      %70 = tpu.iota {dimensions = array<i32: 0>} : vector<16x8xi32>
      %71 = tpu.iota {dimensions = array<i32: 1>} : vector<16x8xi32>
      %c0_31 = arith.constant 0 : index
      %c0_32 = arith.constant 0 : index
      %72 = vector.load %arg8[%c0_31, %c0_32] : memref<16x1xf32, #tpu.memory_space<vmem>>, vector<16x1xf32>
      %c8_i32_33 = arith.constant 8 : i32
      %73 = arith.muli %63, %c8_i32_33 : i32
      %74 = vector.broadcast %73 : i32 to vector<16x8xi32>
      %75 = arith.addi %71, %74 : vector<16x8xi32>
      %76 = arith.cmpi eq, %70, %75 : vector<16x8xi32>
      %cst_34 = arith.constant 0.000000e+00 : f32
      %77 = vector.broadcast %cst_34 : f32 to vector<16x8xf32>
      %78 = arith.select %76, %8, %77 : vector<16x8xi1>, vector<16x8xf32>
      %cst_35 = arith.constant dense<0.000000e+00> : vector<16xf32>
      %79 = vector.multi_reduction <add>, %78, %cst_35 [1] : vector<16x8xf32> to vector<16xf32>
      %80 = vector.shape_cast %79 : vector<16xf32> to vector<16x1xf32>
      %81 = arith.addf %72, %80 : vector<16x1xf32>
      %c0_36 = arith.constant 0 : index
      %c0_37 = arith.constant 0 : index
      %82 = vector.load %arg8[%c0_36, %c0_37] : memref<16x1xf32, #tpu.memory_space<vmem>>, vector<16x1xf32>
      tpu.vector_store %arg8[%c0_36, %c0_37], %81 {strides = array<i32>} : memref<16x1xf32, #tpu.memory_space<vmem>>, vector<16x1xf32>,
    } else {
    }
    %c1_i32_29 = arith.constant 1 : i32
    %67 = arith.cmpi eq, %arg1, %c1_i32_29 : i32
    %68 = arith.extui %67 : i1 to i32
    %c0_i32_30 = arith.constant 0 : i32
    %69 = arith.cmpi ne, %68, %c0_i32_30 : i32
    scf.if %69 {
      %c0_31 = arith.constant 0 : index
      %c0_32 = arith.constant 0 : index
      %70 = vector.load %arg6[%c0_31, %c0_32] : memref<16x1xf32, #tpu.memory_space<vmem>>, vector<16x1xf32>
      %c0_33 = arith.constant 0 : index
      %c0_34 = arith.constant 0 : index
      %71 = vector.load %arg7[%c0_33, %c0_34] : memref<16x1xf32, #tpu.memory_space<vmem>>, vector<16x1xf32>
      %72 = arith.subf %70, %71 : vector<16x1xf32>
      %73 = math.log %72 : vector<16x1xf32>
      %74 = vector.broadcast %3 : f32 to vector<16x1xf32>
      %75 = arith.addf %73, %74 : vector<16x1xf32>
      %c0_35 = arith.constant 0 : index
      %c0_36 = arith.constant 0 : index
      %76 = vector.load %arg8[%c0_35, %c0_36] : memref<16x1xf32, #tpu.memory_space<vmem>>, vector<16x1xf32>
      %77 = arith.subf %75, %76 : vector<16x1xf32>
      %c16_i32 = arith.constant 16 : i32
      %78 = arith.muli %arg0, %c16_i32 : i32
      %79 = tpu.iota {dimensions = array<i32: 0>} : vector<16x1xi32>
      %80 = vector.broadcast %78 : i32 to vector<16x1xi32>
      %81 = arith.addi %80, %79 : vector<16x1xi32>
      %c8_i32_37 = arith.constant 8 : i32
      %c0_i32_38 = arith.constant 0 : i32
      %82 = arith.cmpi eq, %c8_i32_37, %c0_i32_38 : i32
      %c1_i32_39 = arith.constant 1 : i32
      %83 = arith.select %82, %c1_i32_39, %c8_i32_37 : i32
      %84 = vector.broadcast %83 : i32 to vector<16x1xi32>
      %85 = arith.remsi %81, %84 : vector<16x1xi32>
      %c0_i32_40 = arith.constant 0 : i32
      %86 = vector.broadcast %c0_i32_40 : i32 to vector<16x1xi32>
      %87 = arith.cmpi ne, %85, %86 : vector<16x1xi32>
      %c0_i32_41 = arith.constant 0 : i32
      %88 = vector.broadcast %c0_i32_41 : i32 to vector<16x1xi32>
      %89 = arith.cmpi slt, %85, %88 : vector<16x1xi32>
      %c0_i32_42 = arith.constant 0 : i32
      %90 = arith.cmpi slt, %83, %c0_i32_42 : i32
      %91 = vector.broadcast %90 : i1 to vector<16x1xi1>
      %92 = vector.broadcast %91 : vector<16x1xi1> to vector<16x1xi1>
      %93 = arith.xori %89, %92 : vector<16x1xi1>
      %94 = arith.andi %93, %87 : vector<16x1xi1>
      %95 = vector.broadcast %83 : i32 to vector<16x1xi32>
      %96 = arith.addi %85, %95 : vector<16x1xi32>
      %97 = arith.select %94, %96, %85 : vector<16x1xi1>, vector<16x1xi32>
      %c4_i32_43 = arith.constant 4 : i32
      %98 = vector.broadcast %c4_i32_43 : i32 to vector<16x1xi32>
      %99 = arith.cmpi slt, %97, %98 : vector<16x1xi32>
      %100 = arith.extui %99 : vector<16x1xi1> to vector<16x1xi32>
      %101 = arith.sitofp %100 : vector<16x1xi32> to vector<16x1xf32>
      %102 = arith.mulf %77, %101 : vector<16x1xf32>
      %c0_44 = arith.constant 0 : index
      %c0_45 = arith.constant 0 : index
      %103 = vector.load %arg5[%c0_44, %c0_45] : memref<16x1xf32, #tpu.memory_space<vmem>>, vector<16x1xf32>
      tpu.vector_store %arg5[%c0_44, %c0_45], %102 {strides = array<i32>} : memref<16x1xf32, #tpu.memory_space<vmem>>, vector<16x1xf32>,
    } else {
    }
    return
  }
  func.func @transform_0(%arg0: i32, %arg1: i32, %arg2: memref<1xf32, #tpu.memory_space<smem>>) -> (i32, i32) {
    %c0_i32 = arith.constant 0 : i32
    %c0_i32_0 = arith.constant 0 : i32
    return %arg0, %c0_i32 : i32, i32
  }
  func.func @transform_1(%arg0: i32, %arg1: i32, %arg2: memref<1xf32, #tpu.memory_space<smem>>) -> (i32, i32) {
    %c0_i32 = arith.constant 0 : i32
    %c0_i32_0 = arith.constant 0 : i32
    return %arg1, %c0_i32 : i32, i32
  }
  func.func @transform_2(%arg0: i32, %arg1: i32, %arg2: memref<1xf32, #tpu.memory_space<smem>>) -> (i32, i32) {
    %c0_i32 = arith.constant 0 : i32
    %c0_i32_0 = arith.constant 0 : i32
    return %arg0, %c0_i32 : i32, i32
  }
}

</mosaic_0001>

<llo_original>
// kernel: ntxent_loss.2
$region0: #{ntxent_loss.2}
  #allocation0 [shape = 'u32[]', space=smem, size = 0x4, offset = 0x4, fixed_abs, tag = 'smem constant byte address 0x4 - core index']
  #allocation1 [shape = 'u32[144,128]{1,0:T(1,128)}', space=vmem, size = 0x12000, scoped, tag = 'internal scratch']
  %s0 = inlined_call_operand.vmem [shape: f32[16,128], index: 0, kind: input, shape index: {}]
  %s1 = inlined_call_operand.vmem [shape: f32[16,128], index: 1, kind: output, shape index: {}]
  %s2 = sld [smem:[#allocation0]]
  $region37: #{ntxent_loss.2} parent=0
    _
  %s4 = ssub.s32 1, %s2
  %s5 = scalar_select 0, %s4, %s2
  loop: start=0, step=1, limit=4
  $region2: #{ntxent_loss.2} parent=0 // loop_pre_header
    _
  $region3: #{ntxent_loss.2} parent=0 // loop_header
    %s7 = sphi 0, %s11
    %p8 = scmp.ge.s32.totalorder %s7, 4
    %s17 = sphi 0, %s19
    %s20 = sphi 0, %s17
    %s21 = sphi 0, %s20
    %s37 = sphi 0, %s21
    %s43 = sphi 0, %s45
    %s46 = sphi 0, %s43
    %s47 = sphi 0, %s46
    %s63 = sphi 0, %s47
  $region4: #{ntxent_loss.2} parent=0 // loop_header_branch
    %10 = sbr.rel (%p8) target = $region8
  $region5: #{ntxent_loss.2} parent=0 // loop_body
    %s12 = ssub.s32 %s7, 1
    %s13 = ssub.s32 %s7, 2
    %s14 = sadd.s32 %s7, 1
    %s15 = ssub.s32 %s7, %s14
    %p16 = scmp.eq.s32.totalorder %s15, 0
    %s18 = sadd.s32 %s17, 1
    %s19 = scalar_select %p16, %s17, %s18
    %p22 = pneg %p16
    %p23 = scmp.eq.s32.totalorder %s7, 1
    %p24 = por %p22, %p23
    %p25 = scmp.ne.s32.totalorder %s17, %s20
    %p26 = scmp.eq.s32.totalorder %s7, 0
    %p27 = por %p25, %p26
    %p28 = scmp.ne.s32.totalorder %s17, %s20
    %p29 = scmp.eq.s32.totalorder %s12, 1
    %p30 = por %p28, %p29
    %p31 = scmp.ne.s32.totalorder %s20, %s21
    %p32 = scmp.eq.s32.totalorder %s12, 0
    %p33 = por %p31, %p32
    %p34 = scmp.ne.s32.totalorder %s20, %s21
    %p35 = scmp.eq.s32.totalorder %s13, 1
    %p36 = por %p34, %p35
    %p38 = scmp.ne.s32.totalorder %s21, %s37
    %p39 = scmp.eq.s32.totalorder %s13, 0
    %p40 = por %p38, %p39
    %s41 = ssub.s32 %s7, %s14
    %p42 = scmp.eq.s32.totalorder %s41, 0
    %s44 = sadd.s32 %s43, 1
    %s45 = scalar_select %p42, %s43, %s44
    %p48 = pneg %p42
    %p49 = scmp.eq.s32.totalorder %s7, 1
    %p50 = por %p48, %p49
    %p51 = scmp.ne.s32.totalorder %s43, %s46
    %p52 = scmp.eq.s32.totalorder %s7, 0
    %p53 = por %p51, %p52
    %p54 = scmp.ne.s32.totalorder %s43, %s46
    %p55 = scmp.eq.s32.totalorder %s12, 1
    %p56 = por %p54, %p55
    %p57 = scmp.ne.s32.totalorder %s46, %s47
    %p58 = scmp.eq.s32.totalorder %s12, 0
    %p59 = por %p57, %p58
    %p60 = scmp.ne.s32.totalorder %s46, %s47
    %p61 = scmp.eq.s32.totalorder %s13, 1
    %p62 = por %p60, %p61
    %p64 = scmp.ne.s32.totalorder %s47, %s63
    %p65 = scmp.eq.s32.totalorder %s13, 0
    %p66 = por %p64, %p65
    %p67 = scmp.le.s32.totalorder 1, %s7
    %p68 = scmp.lt.s32.totalorder %s7, 3
    %p69 = pnand %p67, %p68
    %p70 = pneg %p69
    // Predicated region
    $region9: #{ntxent_loss.2} parent=5 // pred_check
      _
    $region10: #{ntxent_loss.2} parent=5 // pred_check_branch
      %72 = sbr.rel (%p69) target = $region12
    $region11: #{ntxent_loss.2} parent=5 // pred_region
      %s73 = ssub.s32 %s7, 1
    $region12: #{ntxent_loss.2} parent=5 // pred_fallthru
      _
    %p74 = scmp.lt.s32.totalorder %s7, 2
    // Predicated region
    $region13: #{ntxent_loss.2} parent=5 // pred_check
      %p75 = pneg %p74
    $region14: #{ntxent_loss.2} parent=5 // pred_check_branch
      %77 = sbr.rel (%p75) target = $region16
    $region15: #{ntxent_loss.2} parent=5 // pred_region
      // Predicated region
      $region17: #{ntxent_loss.2} parent=15 // pred_check
        %p78 = pneg %p27
      $region18: #{ntxent_loss.2} parent=15 // pred_check_branch
        %80 = sbr.rel (%p78) target = $region20
      $region19: #{ntxent_loss.2} parent=15 // pred_region
        %p81 = scmp.lt.s32.totalorder %s7, 1
        %s82 = scalar_select %p81, %s7, 1
        %s83 = smul.addr %s82, 8
        %s84 = scalar_lea.vmem %s0, %s83
      $region20: #{ntxent_loss.2} parent=15 // pred_fallthru
        _
    $region16: #{ntxent_loss.2} parent=5 // pred_fallthru
      _
    %p85 = scmp.le.s32.totalorder 1, %s7
    %p86 = scmp.lt.s32.totalorder %s7, 3
    %p87 = pnand %p85, %p86
    %p88 = pneg %p87
    // Predicated region
    $region21: #{ntxent_loss.2} parent=5 // pred_check
      _
    $region22: #{ntxent_loss.2} parent=5 // pred_check_branch
      %90 = sbr.rel (%p87) target = $region24
    $region23: #{ntxent_loss.2} parent=5 // pred_region
      %s91 = ssub.s32 %s7, 1
      %p92 = scmp.lt.s32.totalorder %s12, 1
      %s93 = scalar_select %p92, %s12, 1
      %s94 = smul.addr %s93, 8
      %s95 = scalar_lea.vmem %s0, %s94
      %p96 = pneg %p33
      %p97 = pneg %p30
      %p98 = pneg %p59
      %p99 = pneg %p56
      %p100 = scmp.lt.s32.totalorder %s12, 1
      %s101 = scalar_select %p100, %s12, 1
      %s102 = smul.addr %s101, 8
      %s103 = scalar_lea.vmem %s1, %s102
      %p104 = scmp.lt.s32.totalorder %s12, 1
      %s105 = scalar_select %p104, %s12, 1
      %s106 = smul.addr %s105, 8
      %s107 = scalar_lea.vmem %s0, %s106
      %p108 = scmp.lt.s32.totalorder %s12, 1
      %s109 = scalar_select %p108, %s12, 1
      %s110 = smul.addr %s109, 8
      %s111 = scalar_lea.vmem %s1, %s110
      %v112 = vld [vmem:[%s107] sm:$0xff]
      %v113 = vmul.f32 %v112, %v112
      %114 = vadd.xlane.f32.xlu0 %v113
      %v115 = vpop.xlane.xlu0 %114
      %v116 = vmax.f32 %v115, 1e-24
      %v117 = vrsqrt.pop %v116
      %v118 = vmul.f32 %v112, %v117
      %119 = vst [vmem:[%s111] sm:$0xff] %v118
      %p120 = scmp.lt.s32.totalorder %s12, 1
      %s121 = scalar_select %p120, %s12, 1
      %s122 = smul.addr %s121, 8
      %s123 = scalar_lea.vmem %s1, %s122
      // Predicated region
      $region25: #{ntxent_loss.2} parent=23 // pred_check
        %p124 = pneg %p56
      $region26: #{ntxent_loss.2} parent=23 // pred_check_branch
        %126 = sbr.rel (%p124) target = $region28
      $region27: #{ntxent_loss.2} parent=23 // pred_region
        _
      $region28: #{ntxent_loss.2} parent=23 // pred_fallthru
        _
    $region24: #{ntxent_loss.2} parent=5 // pred_fallthru
      _
    %p127 = scmp.le.s32.totalorder 2, %s7
    // Predicated region
    $region29: #{ntxent_loss.2} parent=5 // pred_check
      %p128 = pneg %p127
    $region30: #{ntxent_loss.2} parent=5 // pred_check_branch
      %130 = sbr.rel (%p128) target = $region32
    $region31: #{ntxent_loss.2} parent=5 // pred_region
      %s131 = ssub.s32 %s7, 2
      // Predicated region
      $region33: #{ntxent_loss.2} parent=31 // pred_check
        %p132 = pneg %p62
      $region34: #{ntxent_loss.2} parent=31 // pred_check_branch
        %134 = sbr.rel (%p132) target = $region36
      $region35: #{ntxent_loss.2} parent=31 // pred_region
        %p135 = scmp.lt.s32.totalorder %s13, 1
        %s136 = scalar_select %p135, %s13, 1
        %s137 = smul.addr %s136, 8
        %s138 = scalar_lea.vmem %s1, %s137
      $region36: #{ntxent_loss.2} parent=31 // pred_fallthru
        _
    $region32: #{ntxent_loss.2} parent=5 // pred_fallthru
      _
  $region6: #{ntxent_loss.2} parent=0 // loop_footer
    %s11 = sadd.s32 1, %s7
  $region7: #{ntxent_loss.2} parent=0 // loop_footer_branch
    %6 = sbr.rel target = $region3
  $region8: #{ntxent_loss.2} parent=0 // loop_exit
    _

// kernel: ntxent_loss.3
$region0: #{ntxent_loss.3}
  #allocation0 [shape = 'u32[]', space=smem, size = 0x4, offset = 0x4, fixed_abs, tag = 'smem constant byte address 0x4 - core index']
  #allocation1 [shape = 'u32[144,128]{1,0:T(1,128)}', space=vmem, size = 0x12000, scoped, tag = 'internal scratch']
  #allocation2 [shape = 'f32[16,1]{1,0:T(8,128)}', space=vmem, size = 0x2000, scoped, tag = 'scratch operand']
  #allocation3 [shape = 'f32[16,1]{1,0:T(8,128)}', space=vmem, size = 0x2000, scoped, tag = 'scratch operand']
  #allocation4 [shape = 'f32[16,1]{1,0:T(8,128)}', space=vmem, size = 0x2000, scoped, tag = 'scratch operand']
  #allocation5 [shape = 's32[1]{0}', space=sflag, size = 0x4, scoped, tag = 'scoped memory for ntxent_loss.3']
  #allocation6 [shape = 'f32[1]{0:T(128)S(6)}', space=smem, size = 0x200, scoped, tag = 'prefetched SMEM operand 0']
  %s0 = inlined_call_operand.<no memory space> [shape: f32[1], index: 0, kind: input, shape index: {}]
  %s1 = inlined_call_operand.vmem [shape: f32[16,128], index: 1, kind: input, shape index: {}, may-alias: {1,2}]
  %s2 = inlined_call_operand.vmem [shape: f32[16,128], index: 2, kind: input, shape index: {}, may-alias: {1,2}]
  %s3 = inlined_call_operand.vmem [shape: f32[16,1], index: 3, kind: output, shape index: {}]
  %s4 = sld [smem:[#allocation0]]
  $region57: #{ntxent_loss.3} parent=0
    _
  %s6 = ssub.s32 1, %s4
  %s7 = scalar_select 0, %s6, %s4
  %8 = sst [smem:[#allocation6]] %s0
  loop: start=0, step=1, limit=4
  $region2: #{ntxent_loss.3} parent=0 // loop_pre_header
    _
  $region3: #{ntxent_loss.3} parent=0 // loop_header
    %s10 = sphi 0, %s14
    %p11 = scmp.ge.s32.totalorder %s10, 4
    %s17 = sphi 0, %s29
    %s18 = sphi 0, %s25
    %s19 = sphi 0, %s17
    %s20 = sphi 0, %s18
    %s21 = sphi 0, %s19
    %s22 = sphi 0, %s20
    %s32 = sphi 0, %s34
    %s35 = sphi 0, %s32
    %s36 = sphi 0, %s35
    %s52 = sphi 0, %s36
    %s58 = sphi 0, %s60
    %s61 = sphi 0, %s58
    %s62 = sphi 0, %s61
    %s78 = sphi 0, %s62
    %s84 = sphi 0, %s86
    %s87 = sphi 0, %s84
    %s88 = sphi 0, %s87
    %s104 = sphi 0, %s88
  $region4: #{ntxent_loss.3} parent=0 // loop_header_branch
    %13 = sbr.rel (%p11) target = $region8
  $region5: #{ntxent_loss.3} parent=0 // loop_body
    %s15 = ssub.s32 %s10, 1
    %s16 = ssub.s32 %s10, 2
    %s23 = sadd.s32 1, %s18
    %p24 = scmp.ge.s32.totalorder %s23, 2
    %s25 = scalar_select %p24, 0, %s23
    %s26 = sadd.s32 1, %s17
    %s27 = scalar_select %p24, %s26, %s17
    %p28 = scmp.ge.s32.totalorder %s27, 1
    %s29 = scalar_select %p28, 0, %s27
    %s30 = ssub.s32 %s17, %s29
    %p31 = scmp.eq.s32.totalorder %s30, 0
    %s33 = sadd.s32 %s32, 1
    %s34 = scalar_select %p31, %s32, %s33
    %p37 = pneg %p31
    %p38 = scmp.eq.s32.totalorder %s10, 1
    %p39 = por %p37, %p38
    %p40 = scmp.ne.s32.totalorder %s32, %s35
    %p41 = scmp.eq.s32.totalorder %s10, 0
    %p42 = por %p40, %p41
    %p43 = scmp.ne.s32.totalorder %s32, %s35
    %p44 = scmp.eq.s32.totalorder %s15, 1
    %p45 = por %p43, %p44
    %p46 = scmp.ne.s32.totalorder %s35, %s36
    %p47 = scmp.eq.s32.totalorder %s15, 0
    %p48 = por %p46, %p47
    %p49 = scmp.ne.s32.totalorder %s35, %s36
    %p50 = scmp.eq.s32.totalorder %s16, 1
    %p51 = por %p49, %p50
    %p53 = scmp.ne.s32.totalorder %s36, %s52
    %p54 = scmp.eq.s32.totalorder %s16, 0
    %p55 = por %p53, %p54
    %s56 = ssub.s32 %s18, %s25
    %p57 = scmp.eq.s32.totalorder %s56, 0
    %s59 = sadd.s32 %s58, 1
    %s60 = scalar_select %p57, %s58, %s59
    %p63 = pneg %p57
    %p64 = scmp.eq.s32.totalorder %s10, 1
    %p65 = por %p63, %p64
    %p66 = scmp.ne.s32.totalorder %s58, %s61
    %p67 = scmp.eq.s32.totalorder %s10, 0
    %p68 = por %p66, %p67
    %p69 = scmp.ne.s32.totalorder %s58, %s61
    %p70 = scmp.eq.s32.totalorder %s15, 1
    %p71 = por %p69, %p70
    %p72 = scmp.ne.s32.totalorder %s61, %s62
    %p73 = scmp.eq.s32.totalorder %s15, 0
    %p74 = por %p72, %p73
    %p75 = scmp.ne.s32.totalorder %s61, %s62
    %p76 = scmp.eq.s32.totalorder %s16, 1
    %p77 = por %p75, %p76
    %p79 = scmp.ne.s32.totalorder %s62, %s78
    %p80 = scmp.eq.s32.totalorder %s16, 0
    %p81 = por %p79, %p80
    %s82 = ssub.s32 %s17, %s29
    %p83 = scmp.eq.s32.totalorder %s82, 0
    %s85 = sadd.s32 %s84, 1
    %s86 = scalar_select %p83, %s84, %s85
    %p89 = pneg %p83
    %p90 = scmp.eq.s32.totalorder %s10, 1
    %p91 = por %p89, %p90
    %p92 = scmp.ne.s32.totalorder %s84, %s87
    %p93 = scmp.eq.s32.totalorder %s10, 0
    %p94 = por %p92, %p93
    %p95 = scmp.ne.s32.totalorder %s84, %s87
    %p96 = scmp.eq.s32.totalorder %s15, 1
    %p97 = por %p95, %p96
    %p98 = scmp.ne.s32.totalorder %s87, %s88
    %p99 = scmp.eq.s32.totalorder %s15, 0
    %p100 = por %p98, %p99
    %p101 = scmp.ne.s32.totalorder %s87, %s88
    %p102 = scmp.eq.s32.totalorder %s16, 1
    %p103 = por %p101, %p102
    %p105 = scmp.ne.s32.totalorder %s88, %s104
    %p106 = scmp.eq.s32.totalorder %s16, 0
    %p107 = por %p105, %p106
    %p108 = scmp.le.s32.totalorder 1, %s10
    %p109 = scmp.lt.s32.totalorder %s10, 3
    %p110 = pnand %p108, %p109
    %p111 = pneg %p110
    // Predicated region
    $region9: #{ntxent_loss.3} parent=5 // pred_check
      _
    $region10: #{ntxent_loss.3} parent=5 // pred_check_branch
      %113 = sbr.rel (%p110) target = $region12
    $region11: #{ntxent_loss.3} parent=5 // pred_region
      %s114 = ssub.s32 %s10, 1
      // Predicated region
      $region13: #{ntxent_loss.3} parent=11 // pred_check
        %p115 = pneg %p48
      $region14: #{ntxent_loss.3} parent=11 // pred_check_branch
        %117 = sbr.rel (%p115) target = $region16
      $region15: #{ntxent_loss.3} parent=11 // pred_region
        %s118 = smul.u32 2, %s19
        %p119 = scmp.lt.s32.totalorder %s118, 1
        %s120 = scalar_select %p119, %s118, 1
        %s121 = smul.addr %s120, 8
        %s122 = scalar_lea.vmem %s1, %s121
        %s123 = smul.u32 2, %s19
      $region16: #{ntxent_loss.3} parent=11 // pred_fallthru
        _
    $region12: #{ntxent_loss.3} parent=5 // pred_fallthru
      _
    %p124 = scmp.lt.s32.totalorder %s10, 2
    // Predicated region
    $region17: #{ntxent_loss.3} parent=5 // pred_check
      %p125 = pneg %p124
    $region18: #{ntxent_loss.3} parent=5 // pred_check_branch
      %127 = sbr.rel (%p125) target = $region20
    $region19: #{ntxent_loss.3} parent=5 // pred_region
      // Predicated region
      $region21: #{ntxent_loss.3} parent=19 // pred_check
        %p128 = pneg %p68
      $region22: #{ntxent_loss.3} parent=19 // pred_check_branch
        %130 = sbr.rel (%p128) target = $region24
      $region23: #{ntxent_loss.3} parent=19 // pred_region
        %p131 = scmp.lt.s32.totalorder %s18, 1
        %s132 = scalar_select %p131, %s18, 1
        %s133 = smul.addr %s132, 8
        %s134 = scalar_lea.vmem %s2, %s133
      $region24: #{ntxent_loss.3} parent=19 // pred_fallthru
        _
    $region20: #{ntxent_loss.3} parent=5 // pred_fallthru
      _
    %p135 = scmp.le.s32.totalorder 1, %s10
    %p136 = scmp.lt.s32.totalorder %s10, 3
    %p137 = pnand %p135, %p136
    %p138 = pneg %p137
    // Predicated region
    $region25: #{ntxent_loss.3} parent=5 // pred_check
      _
    $region26: #{ntxent_loss.3} parent=5 // pred_check_branch
      %140 = sbr.rel (%p137) target = $region28
    $region27: #{ntxent_loss.3} parent=5 // pred_region
      %s141 = ssub.s32 %s10, 1
      %s142 = smul.u32 2, %s19
      %p143 = scmp.lt.s32.totalorder %s142, 1
      %s144 = scalar_select %p143, %s142, 1
      %s145 = smul.addr %s144, 8
      %s146 = scalar_lea.vmem %s1, %s145
      %p147 = pneg %p48
      %p148 = pneg %p45
      %p149 = scmp.lt.s32.totalorder %s20, 1
      %s150 = scalar_select %p149, %s20, 1
      %s151 = smul.addr %s150, 8
      %s152 = scalar_lea.vmem %s2, %s151
      %p153 = pneg %p74
      %p154 = pneg %p71
      %p155 = pneg %p100
      %p156 = pneg %p97
      %s157 = smul.u32 2, %s19
      %p158 = scmp.lt.s32.totalorder %s157, 1
      %s159 = scalar_select %p158, %s157, 1
      %s160 = smul.addr %s159, 8
      %s161 = scalar_lea.vmem %s3, %s160
      %s162 = smul.u32 2, %s19
      %p163 = scmp.lt.s32.totalorder %s162, 1
      %s164 = scalar_select %p163, %s162, 1
      %s165 = smul.addr %s164, 8
      %s166 = scalar_lea.vmem %s1, %s165
      %s167 = smul.u32 2, %s19
      %p168 = scmp.lt.s32.totalorder %s20, 1
      %s169 = scalar_select %p168, %s20, 1
      %s170 = smul.addr %s169, 8
      %s171 = scalar_lea.vmem %s2, %s170
      %s172 = smul.u32 2, %s19
      %p173 = scmp.lt.s32.totalorder %s172, 1
      %s174 = scalar_select %p173, %s172, 1
      %s175 = smul.addr %s174, 8
      %s176 = scalar_lea.vmem %s3, %s175
      %s177 = smul.u32 2, %s19
      %p178 = scmp.eq.s32.totalorder %s20, 0
      // Predicated region
      $region29: #{ntxent_loss.3} parent=27 // pred_check
        %p179 = pneg %p178
      $region30: #{ntxent_loss.3} parent=27 // pred_check_branch
        %181 = sbr.rel (%p179) target = $region32
      $region31: #{ntxent_loss.3} parent=27 // pred_region
        %vm182 = vcmask 7168
        %183 = vst.msk [vmem:[#allocation2] sm:$0xff] %vm182, 0.0
        %184 = vst.msk [vmem:[#allocation2 + $0x8] sm:$0xff] %vm182, 0.0
        %185 = vst.msk [vmem:[#allocation3] sm:$0xff] %vm182, 0.0
        %186 = vst.msk [vmem:[#allocation3 + $0x8] sm:$0xff] %vm182, 0.0
        %187 = vst.msk [vmem:[#allocation4] sm:$0xff] %vm182, 0.0
        %188 = vst.msk [vmem:[#allocation4 + $0x8] sm:$0xff] %vm182, 0.0
      $region32: #{ntxent_loss.3} parent=27 // pred_fallthru
        _
      %s189 = sld [smem:[#allocation6]]
      %v190 = vld [vmem:[%s166] sm:$0xff]
      %v191 = vld [vmem:[%s166 + $0x8] sm:$0xff]
      %v192 = vld [vmem:[%s171] sm:$0xff]
      %193 = vmatprep.subr.mxu0 0.0
      %194 = vmatpush1.xpose.msra.mxu0 0.0
      %195 = vmatprep.subr.mxu0 0.0
      %196 = vmatpush1.xpose.msra.mxu0 0.0
      %197 = vmatprep.subr.mxu0 0.0
      %198 = vmatpush1.xpose.msra.mxu0 0.0
      %199 = vmatprep.subr.mxu0 0.0
      %200 = vmatpush1.xpose.msra.mxu0 0.0
      %201 = vmatprep.subr.mxu0 0.0
      %202 = vmatpush1.xpose.msra.mxu0 0.0
      %203 = vmatprep.subr.mxu0 0.0
      %204 = vmatpush1.xpose.msra.mxu0 0.0
      %205 = vmatprep.subr.mxu0 0.0
      %206 = vmatpush1.xpose.msra.mxu0 0.0
      %207 = vmatprep.subr.mxu0 0.0
      %208 = vmatpush1.xpose.msra.mxu0 0.0
      %209 = vmatprep.subr.mxu0 0.0
      %210 = vmatpush1.xpose.msra.mxu0 0.0
      %211 = vmatprep.subr.mxu0 0.0
      %212 = vmatpush1.xpose.msra.mxu0 0.0
      %213 = vmatprep.subr.mxu0 0.0
      %214 = vmatpush1.xpose.msra.mxu0 0.0
      %215 = vmatprep.subr.mxu0 0.0
      %216 = vmatpush1.xpose.msra.mxu0 0.0
      %217 = vmatprep.subr.mxu0 0.0
      %218 = vmatpush1.xpose.msra.mxu0 0.0
      %219 = vmatprep.subr.mxu0 0.0
      %220 = vmatpush1.xpose.msra.mxu0 0.0
      %221 = vmatprep.subr.mxu0 0.0
      %222 = vmatpush1.xpose.msra.mxu0 0.0
      %223 = vmatprep.subr.mxu0 0.0
      %224 = vmatpush1.xpose.msra.mxu0 %v192
      %225 = vmatprep.subr.mxu0 0.0
      %226 = vmatpush2.xpose.msra.mxu0 0.0
      %227 = vmatprep.subr.mxu0 0.0
      %228 = vmatpush2.xpose.msra.mxu0 0.0
      %229 = vmatprep.subr.mxu0 0.0
      %230 = vmatpush2.xpose.msra.mxu0 0.0
      %231 = vmatprep.subr.mxu0 0.0
      %232 = vmatpush2.xpose.msra.mxu0 0.0
      %233 = vmatprep.subr.mxu0 0.0
      %234 = vmatpush2.xpose.msra.mxu0 0.0
      %235 = vmatprep.subr.mxu0 0.0
      %236 = vmatpush2.xpose.msra.mxu0 0.0
      %237 = vmatprep.subr.mxu0 0.0
      %238 = vmatpush2.xpose.msra.mxu0 0.0
      %239 = vmatprep.subr.mxu0 0.0
      %240 = vmatpush2.xpose.msra.mxu0 0.0
      %241 = vmatprep.subr.mxu0 0.0
      %242 = vmatpush2.xpose.msra.mxu0 0.0
      %243 = vmatprep.subr.mxu0 0.0
      %244 = vmatpush2.xpose.msra.mxu0 0.0
      %245 = vmatprep.subr.mxu0 0.0
      %246 = vmatpush2.xpose.msra.mxu0 0.0
      %247 = vmatprep.subr.mxu0 0.0
      %248 = vmatpush2.xpose.msra.mxu0 0.0
      %249 = vmatprep.subr.mxu0 0.0
      %250 = vmatpush2.xpose.msra.mxu0 0.0
      %251 = vmatprep.subr.mxu0 0.0
      %252 = vmatpush2.xpose.msra.mxu0 0.0
      %253 = vmatprep.subr.mxu0 0.0
      %254 = vmatpush2.xpose.msra.mxu0 0.0
      %255 = vmatprep.subr.mxu0 0.0
      %256 = vmatpush2.xpose.msra.mxu0 0.0
      %257 = vmatprep.mubr.f32.mxu0 0.0
      %258 = vmatmul.mubr.f32.gmra.mxu0 %v190
      %v259 = vpop.f32.mrf.mxu0
      %v260 = vadd.f32 0.0, %v259
      %v261 = vpop.f32.mrf.mxu0
      %262 = vmatprep.mubr.f32.mxu0 0.0
      %263 = vmatmul.mubr.f32.gmra.mxu0 %v191
      %v264 = vpop.f32.mrf.mxu0
      %v265 = vadd.f32 0.0, %v264
      %v266 = vpop.f32.mrf.mxu0
      %267 = vdwg.mxu0
      %v268 = vstv %s189
      %v269 = vmul.f32 %v260, %v268
      %v270 = vmul.f32 %v265, %v268
      %v271 = vsub.f32 %v269, %v268
      %v272 = vsub.f32 %v270, %v268
      %v273 = vmul.f32 %v271, 1.442695
      %v274 = vpow.pop %v273
      %v275 = vmul.f32 %v272, 1.442695
      %v276 = vpow.pop %v275
      %s277 = smul.u32 %s20, 8
      %v278 = vlaneseq
      %v279 = vand.u32 %v278, 127
      %v280 = vstv %s277
      %v281 = vadd.s32 %v280, %v279
      %vm282 = vcmp.lt.s32.totalorder %v281, 0
      %v283 = vsub.s32 0, %v281
      %v284 = vsel %vm282, %v283, %v281
      %v285 = vshrl.u32 %v284, 3
      %v286 = vand.u32 %v284, 7
      %v287 = vsub.s32 0, %v286
      %v288 = vsel %vm282, %v287, %v286
      %vm289 = vcmp.ne.s32.totalorder %v288, 0
      %vm290 = vcmp.lt.s32.totalorder %v288, 0
      %vm291 = vmand %vm290, %vm289
      %v292 = vadd.s32 %v288, 8
      %v293 = vsel %vm291, %v292, %v288
      %vm294 = vcmp.lt.s32.totalorder %v293, 4
      %v295 = vsel %vm294, 1, 0
      %v296 = vcvt.s32.f32 %v295
      %v297 = vld [vmem:[#allocation2] sm:$0xff]
      %v298 = vld [vmem:[#allocation2 + $0x8] sm:$0xff]
      %v299 = vmul.f32 %v274, %v296
      %v300 = vmul.f32 %v276, %v296
      %vm301 = vcmask 64512
      %v302 = vsel %vm301, %v299, 0.0
      %303 = vadd.xlane.f32.xlu0 %v302
      %v304 = vpop.xlane.xlu0 %303
      %v305 = vsel %vm301, %v300, 0.0
      %306 = vadd.xlane.f32.xlu0 %v305
      %v307 = vpop.xlane.xlu0 %306
      %v308 = vadd.f32 %v297, %v304
      %v309 = vadd.f32 %v298, %v307
      %vm310 = vcmask 7168
      %311 = vst.msk [vmem:[#allocation2] sm:$0xff] %vm310, %v308
      %312 = vst.msk [vmem:[#allocation2 + $0x8] sm:$0xff] %vm310, %v309
      %s313 = smul.u32 %s19, 2
      %s314 = ssub.s32 %s20, %s313
      %p315 = scmp.ge.s32.totalorder %s314, 0
      %p316 = scmp.lt.s32.totalorder %s314, 2
      %p317 = pnand %p315, %p316
      %p318 = pneg %p317
      // Predicated region
      $region33: #{ntxent_loss.3} parent=27 // pred_check
        _
      $region34: #{ntxent_loss.3} parent=27 // pred_check_branch
        %320 = sbr.rel (%p317) target = $region36
      $region35: #{ntxent_loss.3} parent=27 // pred_region
        %v321 = vlaneseq
        %v322 = vshrl.u32 %v321, 7
        %v323 = vadd.s32 %v322, 8
        %v324 = vld [vmem:[#allocation3] sm:$0xff]
        %v325 = vld [vmem:[#allocation3 + $0x8] sm:$0xff]
        %s326 = smul.u32 %s314, 8
        %v327 = vstv %s326
        %v328 = vadd.s32 %v279, %v327
        %vm329 = vcmp.eq.s32.totalorder %v322, %v328
        %vm330 = vcmp.eq.s32.totalorder %v323, %v328
        %v331 = vsel %vm329, %v274, 0.0
        %v332 = vsel %vm330, %v276, 0.0
        %v333 = vsel %vm301, %v331, 0.0
        %334 = vadd.xlane.f32.xlu0 %v333
        %v335 = vpop.xlane.xlu0 %334
        %v336 = vsel %vm301, %v332, 0.0
        %337 = vadd.xlane.f32.xlu0 %v336
        %v338 = vpop.xlane.xlu0 %337
        %v339 = vadd.f32 %v324, %v335
        %v340 = vadd.f32 %v325, %v338
        %341 = vst.msk [vmem:[#allocation3] sm:$0xff] %vm310, %v339
        %342 = vst.msk [vmem:[#allocation3 + $0x8] sm:$0xff] %vm310, %v340
      $region36: #{ntxent_loss.3} parent=27 // pred_fallthru
        _
      %s343 = ssub.s32 %s20, 1
      %s344 = ssub.s32 %s343, %s313
      %s345 = sadd.s32 %s344, 4
      %p346 = scmp.lt.s32.totalorder %s345, 0
      %s347 = ssub.s32 0, %s345
      %s348 = scalar_select %p346, %s347, %s345
      %s349 = sand.u32 %s348, 1
      %s350 = ssub.s32 0, %s349
      %s351 = scalar_select %p346, %s350, %s349
      %p352 = scmp.ne.s32.totalorder %s351, 0
      %p353 = scmp.lt.s32.totalorder %s351, 0
      %p354 = pnand %p353, %p352
      %p355 = pneg %p354
      %s356 = sadd.s32 %s351, 2
      %s357 = scalar_select %p355, %s356, %s351
      %p358 = scmp.lt.s32.totalorder %s357, 2
      // Predicated region
      $region37: #{ntxent_loss.3} parent=27 // pred_check
        %p359 = pneg %p358
      $region38: #{ntxent_loss.3} parent=27 // pred_check_branch
        %361 = sbr.rel (%p359) target = $region40
      $region39: #{ntxent_loss.3} parent=27 // pred_region
        %v362 = vlaneseq
        %v363 = vshrl.u32 %v362, 7
        %v364 = vadd.s32 %v363, 8
        %v365 = vld [vmem:[#allocation4] sm:$0xff]
        %v366 = vld [vmem:[#allocation4 + $0x8] sm:$0xff]
        %s367 = smul.u32 %s357, 8
        %v368 = vstv %s367
        %v369 = vadd.s32 %v279, %v368
        %vm370 = vcmp.eq.s32.totalorder %v363, %v369
        %vm371 = vcmp.eq.s32.totalorder %v364, %v369
        %v372 = vsel %vm370, %v269, 0.0
        %v373 = vsel %vm371, %v270, 0.0
        %v374 = vsel %vm301, %v372, 0.0
        %375 = vadd.xlane.f32.xlu0 %v374
        %v376 = vpop.xlane.xlu0 %375
        %v377 = vsel %vm301, %v373, 0.0
        %378 = vadd.xlane.f32.xlu0 %v377
        %v379 = vpop.xlane.xlu0 %378
        %v380 = vadd.f32 %v365, %v376
        %v381 = vadd.f32 %v366, %v379
        %382 = vst.msk [vmem:[#allocation4] sm:$0xff] %vm310, %v380
        %383 = vst.msk [vmem:[#allocation4 + $0x8] sm:$0xff] %vm310, %v381
      $region40: #{ntxent_loss.3} parent=27 // pred_fallthru
        _
      %p384 = scmp.eq.s32.totalorder %s20, 1
      // Predicated region
      $region41: #{ntxent_loss.3} parent=27 // pred_check
        %p385 = pneg %p384
      $region42: #{ntxent_loss.3} parent=27 // pred_check_branch
        %387 = sbr.rel (%p385) target = $region44
      $region43: #{ntxent_loss.3} parent=27 // pred_region
        %v388 = vld [vmem:[#allocation2] sm:$0xff]
        %v389 = vld [vmem:[#allocation2 + $0x8] sm:$0xff]
        %v390 = vld [vmem:[#allocation3] sm:$0xff]
        %v391 = vld [vmem:[#allocation3 + $0x8] sm:$0xff]
        %v392 = vsub.f32 %v388, %v390
        %v393 = vsub.f32 %v389, %v391
        %v394 = vlog2.pop %v392
        %v395 = vmul.f32 %v394, 0.6931472
        %v396 = vlog2.pop %v393
        %v397 = vmul.f32 %v396, 0.6931472
        %v398 = vadd.f32 %v395, %v268
        %v399 = vadd.f32 %v397, %v268
        %v400 = vld [vmem:[#allocation4] sm:$0xff]
        %v401 = vld [vmem:[#allocation4 + $0x8] sm:$0xff]
        %v402 = vsub.f32 %v398, %v400
        %v403 = vsub.f32 %v399, %v401
        %s404 = smul.u32 %s19, 16
        %v405 = vlaneseq
        %v406 = vshrl.u32 %v405, 7
        %v407 = vadd.s32 %v406, 8
        %v408 = vstv %s404
        %v409 = vadd.s32 %v408, %v406
        %v410 = vadd.s32 %v408, %v407
        %vm411 = vcmp.lt.s32.totalorder %v409, 0
        %v412 = vsub.s32 0, %v409
        %v413 = vsel %vm411, %v412, %v409
        %v414 = vshrl.u32 %v413, 3
        %v415 = vand.u32 %v413, 7
        %v416 = vsub.s32 0, %v415
        %v417 = vsel %vm411, %v416, %v415
        %vm418 = vcmp.lt.s32.totalorder %v410, 0
        %v419 = vsub.s32 0, %v410
        %v420 = vsel %vm418, %v419, %v410
        %v421 = vshrl.u32 %v420, 3
        %v422 = vand.u32 %v420, 7
        %v423 = vsub.s32 0, %v422
        %v424 = vsel %vm418, %v423, %v422
        %vm425 = vcmp.ne.s32.totalorder %v417, 0
        %vm426 = vcmp.ne.s32.totalorder %v424, 0
        %vm427 = vcmp.lt.s32.totalorder %v417, 0
        %vm428 = vcmp.lt.s32.totalorder %v424, 0
        %vm429 = vmand %vm427, %vm425
        %vm430 = vmand %vm428, %vm426
        %v431 = vadd.s32 %v417, 8
        %v432 = vadd.s32 %v424, 8
        %v433 = vsel %vm429, %v431, %v417
        %v434 = vsel %vm430, %v432, %v424
        %vm435 = vcmp.lt.s32.totalorder %v433, 4
        %vm436 = vcmp.lt.s32.totalorder %v434, 4
        %v437 = vsel %vm435, 1, 0
        %v438 = vsel %vm436, 1, 0
        %v439 = vcvt.s32.f32 %v437
        %v440 = vcvt.s32.f32 %v438
        %v441 = vmul.f32 %v402, %v439
        %v442 = vmul.f32 %v403, %v440
        %443 = vst.msk [vmem:[%s176] sm:$0xff] %vm310, %v441
        %444 = vst.msk [vmem:[%s176 + $0x8] sm:$0xff] %vm310, %v442
      $region44: #{ntxent_loss.3} parent=27 // pred_fallthru
        _
      %s445 = smul.u32 2, %s19
      %p446 = scmp.lt.s32.totalorder %s445, 1
      %s447 = scalar_select %p446, %s445, 1
      %s448 = smul.addr %s447, 8
      %s449 = scalar_lea.vmem %s3, %s448
      // Predicated region
      $region45: #{ntxent_loss.3} parent=27 // pred_check
        %p450 = pneg %p97
      $region46: #{ntxent_loss.3} parent=27 // pred_check_branch
        %452 = sbr.rel (%p450) target = $region48
      $region47: #{ntxent_loss.3} parent=27 // pred_region
        %s453 = smul.u32 2, %s19
      $region48: #{ntxent_loss.3} parent=27 // pred_fallthru
        _
      // Predicated region
      $region49: #{ntxent_loss.3} parent=27 // pred_check
        %p454 = pneg %p97
      $region50: #{ntxent_loss.3} parent=27 // pred_check_branch
        %456 = sbr.rel (%p454) target = $region52
      $region51: #{ntxent_loss.3} parent=27 // pred_region
        %s457 = smul.u32 2, %s19
        %p458 = scmp.lt.s32.totalorder %s457, 1
        %s459 = scalar_select %p458, %s457, 1
        %s460 = smul.addr %s459, 8
        %s461 = scalar_lea.vmem %s3, %s460
      $region52: #{ntxent_loss.3} parent=27 // pred_fallthru
        _
    $region28: #{ntxent_loss.3} parent=5 // pred_fallthru
      _
    %p462 = scmp.le.s32.totalorder 2, %s10
    // Predicated region
    $region53: #{ntxent_loss.3} parent=5 // pred_check
      %p463 = pneg %p462
    $region54: #{ntxent_loss.3} parent=5 // pred_check_branch
      %465 = sbr.rel (%p463) target = $region56
    $region55: #{ntxent_loss.3} parent=5 // pred_region
      %s466 = ssub.s32 %s10, 2
    $region56: #{ntxent_loss.3} parent=5 // pred_fallthru
      _
  $region6: #{ntxent_loss.3} parent=0 // loop_footer
    %s14 = sadd.s32 1, %s10
  $region7: #{ntxent_loss.3} parent=0 // loop_footer_branch
    %9 = sbr.rel target = $region3
  $region8: #{ntxent_loss.3} parent=0 // loop_exit
    _

</llo_original>
